<compile_context>
chip_gen: v6e
topology: v6e:2x2x1
jax: 0.10.0
libtpu: 0.0.40
codegen_flags: <defaults>
</compile_context>

<pallas_src>
import functools
import math

import jax
import jax.numpy as jnp
from jax.experimental import pallas as pl
from jax.experimental.pallas import tpu as pltpu


# ---------------------------------------------------------------------------
# Pallas kernel: out = x * clamp(diag, -0.95, 0.95)
# ---------------------------------------------------------------------------
def _diag_scale_kernel(diag_ref, x_ref, o_ref):
    # diag_ref: (1, tD) VMEM, x_ref/o_ref: (tb, tD) VMEM.
    # HBM-bandwidth bound; the clamp + f32 upcast are free VPU filler ("max, not sum").
    d = jnp.clip(diag_ref[...].astype(jnp.float32), -0.95, 0.95)
    o_ref[...] = (x_ref[...].astype(jnp.float32) * d).astype(o_ref.dtype)


def _round_up(x, m):
    return ((x + m - 1) // m) * m


@functools.lru_cache(maxsize=1)
def _vmem_capacity_bytes():
    try:
        return int(pltpu.get_tpu_info().vmem_capacity_bytes)
    except Exception:
        return 64 * 2**20  # conservative default (v7x per-TC physical VMEM)


def _sublane_multiple(itemsize):
    # Sub-32-bit dtypes pack along sublanes: f32 -> 8, bf16 -> 16, int8/fp8 -> 32.
    return max(8, 32 // max(1, itemsize))


def _pick_tiles(B, D, itemsize):
    """Choose (tb, tD, vmem_limit): lane-dense blocks sized from a byte target."""
    vmem_cap = _vmem_capacity_bytes()
    sub = _sublane_multiple(itemsize)

    # Per-block byte target / hard cap, generation-aware (bigger blocks on 128 MiB parts).
    target_block_bytes = 4 * 2**20 if vmem_cap <= 64 * 2**20 else 8 * 2**20
    max_block_bytes = 2 * target_block_bytes

    # Lane (last-dim) tile: prefer the full D whenever even a minimal-height block fits
    # (constant diag block index -> no re-DMA of the diag row, grid effectively 1-D).
    row_bytes = D * itemsize
    if sub * row_bytes <= max_block_bytes:
        tD = D
    else:
        # Huge D: lane-aligned tile; last block may be partial (pl.cdiv on the D axis).
        max_lanes = max(128, (max_block_bytes // (sub * itemsize)) // 128 * 128)
        tD = min(_round_up(D, 128), max_lanes)

    # Batch (sublane) tile from the byte target; no fixed row cap.
    tb = max(sub, target_block_bytes // (tD * itemsize))
    if B > 2 * sub:
        # Keep >= 2 row blocks so "parallel" semantics can shard across both TCs (v7x).
        tb = min(tb, _round_up((B + 1) // 2, sub))
    tb = max(sub, (tb // sub) * sub)
    if tb >= B:
        tb = B  # a block equal to the full array dim is always legal

    # Resident VMEM ~= 2 buffers x (x tile + out tile) + double-buffered diag row.
    resident = 2 * 2 * tb * tD * itemsize + 2 * tD * itemsize
    cap = min(96 * 2**20, (vmem_cap * 3) // 4)
    vmem_limit = int(min(cap, max(16 * 2**20, 2 * resident)))
    return tb, tD, vmem_limit


def diagonal_linear(x, diagonal, *, use_pallas=None):
    """out = x @ diag(clamp(diagonal, -0.95, 0.95)); x: (..., D), diagonal: (D,)."""
    D = x.shape[-1]
    assert diagonal.shape == (D,)
    out_dtype = jnp.result_type(x.dtype, diagonal.dtype)
    itemsize = jnp.dtype(x.dtype).itemsize

    if use_pallas is None:
        # Below ~8 MiB the launch + pipeline prologue loses to XLA's fused elementwise.
        use_pallas = (x.size * itemsize) >= (8 << 20)
    if not use_pallas:
        clamped = jnp.clip(diagonal, -0.95, 0.95)
        return (x.astype(out_dtype) * clamped.astype(out_dtype))

    lead = x.shape[:-1]
    B = math.prod(lead) if lead else 1
    x2 = x.reshape(B, D)                      # no-op for contiguous inputs
    diag2d = diagonal.reshape(1, D)           # raw diagonal; clamp happens in-kernel

    tb, tD, vmem_limit = _pick_tiles(B, D, itemsize)
    grid = (pl.cdiv(B, tb), pl.cdiv(D, tD))

    out = pl.pallas_call(
        _diag_scale_kernel,
        out_shape=jax.ShapeDtypeStruct((B, D), out_dtype),
        grid_spec=pltpu.PrefetchScalarGridSpec(
            num_scalar_prefetch=0,
            grid=grid,
            in_specs=[
                pl.BlockSpec((1, tD), lambda i, j: (0, j)),    # diagonal row
                pl.BlockSpec((tb, tD), lambda i, j: (i, j)),   # x tile
            ],
            out_specs=pl.BlockSpec((tb, tD), lambda i, j: (i, j)),
        ),
        compiler_params=pltpu.CompilerParams(
            dimension_semantics=("parallel", "parallel"),  # shardable across v7x's 2 TCs
            vmem_limit_bytes=vmem_limit,
        ),
    )(diag2d, x2)
    return out.reshape(*lead, D) if lead else out.reshape(D)


# ---------------------------------------------------------------------------
# HiroLRANDiag in JAX (parameters as a pytree)
# ---------------------------------------------------------------------------
def _linear_init(key, fan_in, fan_out):
    # torch.nn.Linear default init: U(-1/sqrt(fan_in), 1/sqrt(fan_in))
    kw, kb = jax.random.split(key)
    bound = 1.0 / (fan_in ** 0.5)
    W = jax.random.uniform(kw, (fan_in, fan_out), jnp.float32, -bound, bound)
    b = jax.random.uniform(kb, (fan_out,), jnp.float32, -bound, bound)
    return W, b


def init_hiro_params(key, input_dim, output_dim, latent_dim, encoder_dim,
                     encoder_extra_layers=1):
    state_dim = output_dim
    n_keys = 2 * (encoder_extra_layers + 2) + 2
    keys = iter(jax.random.split(key, n_keys))

    encoder = [_linear_init(next(keys), state_dim, encoder_dim)]
    for _ in range(encoder_extra_layers):
        encoder.append(_linear_init(next(keys), encoder_dim, encoder_dim))
    encoder.append(_linear_init(next(keys), encoder_dim, latent_dim))

    decoder = [_linear_init(next(keys), latent_dim, encoder_dim)]
    for _ in range(encoder_extra_layers):
        decoder.append(_linear_init(next(keys), encoder_dim, encoder_dim))
    decoder.append(_linear_init(next(keys), encoder_dim, state_dim))

    kA, kB = next(keys), next(keys)
    a_bound = 1.0 / (latent_dim ** 0.5)
    A_w = jax.random.uniform(kA, (latent_dim, latent_dim), jnp.float32, -a_bound, a_bound)
    # DiagonalLinear init: (2 * rand(latent_dim) - 1) * 0.8
    B_diag = (2.0 * jax.random.uniform(kB, (latent_dim,), jnp.float32) - 1.0) * 0.8

    return dict(
        encoder=encoder,
        decoder=decoder,
        A=A_w,
        B_diag=B_diag,
        bn_gamma=jnp.ones((latent_dim,), jnp.float32),
        bn_beta=jnp.zeros((latent_dim,), jnp.float32),
        dims=dict(input_dim=input_dim, output_dim=output_dim, latent_dim=latent_dim),
    )


def _mlp(layers, x, final_relu):
    n = len(layers)
    for idx, (W, b) in enumerate(layers):
        x = x @ W + b
        if final_relu or idx < n - 1:
            x = jax.nn.relu(x)
    return x


def _batch_norm_train(z, gamma, beta, eps=1e-5):
    # torch BatchNorm1d(latent) in training mode on the permuted (B, latent, seq)
    # tensor: per-channel stats over (batch, seq), biased variance.
    # TODO(synk): running-stats update / eval-mode path not implemented.
    mean = jnp.mean(z, axis=(0, 1), keepdims=True)
    var = jnp.mean((z - mean) ** 2, axis=(0, 1), keepdims=True)
    return (z - mean) * jax.lax.rsqrt(var + eps) * gamma + beta


def hiro_forward(params, padded_input, reset_probability=0.0, nwarmup=0,
                 use_pallas_diag=False):
    dims = params["dims"]
    state_dim = dims["output_dim"]
    input_dim = dims["input_dim"]
    latent_dim = dims["latent_dim"]
    act_len = (input_dim - state_dim) // 2

    x_t = padded_input[:, :, :state_dim]
    u_t1 = padded_input[:, :, state_dim + act_len:]
    assert u_t1.shape[-1] == latent_dim  # required for B(u_t1) in the original module

    z_t = _mlp(params["encoder"], x_t, final_relu=True)
    z_t = _batch_norm_train(z_t, params["bn_gamma"], params["bn_beta"])

    # B(u): elementwise scale by the clamped diagonal.
    if use_pallas_diag:
        Bu = diagonal_linear(u_t1, params["B_diag"], use_pallas=True)
    else:
        # Default: let XLA fuse the scale with the slice producer and the scan consumer
        # — removes ~2 full HBM passes over B*S*L data vs. a standalone kernel call.
        clamped = jnp.clip(params["B_diag"], -0.95, 0.95)
        Bu = u_t1 * clamped

    A_w = params["A"]
    if reset_probability >= 1:
        z_t1 = z_t @ A_w + Bu
    else:
        if reset_probability > 0:
            # TODO(synk): the stochastic per-timestep reset path (host-side torch.rand
            # each step) is nondeterministic and not implemented; only p==0 and p>=1 are.
            raise NotImplementedError("0 < reset_probability < 1 is not supported")
        z_in = jnp.transpose(z_t, (1, 0, 2))   # (S, B, L)
        bu_in = jnp.transpose(Bu, (1, 0, 2))   # (S, B, L)
        ts = jnp.arange(z_in.shape[0])

        def step(prev, xs):
            z_cur, bu_cur, t = xs
            this_input = jnp.where(t <= nwarmup, z_cur, prev)
            out = this_input @ A_w + bu_cur
            return out, out

        _, z_seq = jax.lax.scan(step, z_in[0], (z_in, bu_in, ts))
        z_t1 = jnp.transpose(z_seq, (1, 0, 2))

    return _mlp(params["decoder"], z_t1, final_relu=False)


# ---------------------------------------------------------------------------
# Self-test
# ---------------------------------------------------------------------------
if __name__ == "__main__":
    key = jax.random.PRNGKey(0)
    k_diag, k_x, k_x2, k_params, k_in = jax.random.split(key, 5)

    # --- standalone DiagonalLinear kernel checks (force the Pallas path) ---
    # 1) evenly-divisible shapes
    Bk, Dk = 512, 256
    diag = (2.0 * jax.random.uniform(k_diag, (Dk,), jnp.float32) - 1.0) * 0.8
    xk = jax.random.normal(k_x, (Bk, Dk), jnp.float32)
    out = jax.block_until_ready(diagonal_linear(xk, diag, use_pallas=True))
    ref = xk * jnp.clip(diag, -0.95, 0.95)
    assert out.shape == (Bk, Dk)
    assert jnp.allclose(out, ref, atol=1e-6, rtol=1e-6)

    # 2) ragged batch axis (partial last row-block, masked stores)
    Bk2, Dk2 = 260, 384
    diag2 = (2.0 * jax.random.uniform(k_diag, (Dk2,), jnp.float32) - 1.0) * 0.8
    xk2 = jax.random.normal(k_x2, (Bk2, Dk2), jnp.float32)
    out2 = jax.block_until_ready(diagonal_linear(xk2, diag2, use_pallas=True))
    ref2 = xk2 * jnp.clip(diag2, -0.95, 0.95)
    assert out2.shape == (Bk2, Dk2)
    assert jnp.allclose(out2, ref2, atol=1e-6, rtol=1e-6)

    # --- full HiroLRANDiag forward on small shapes ---
    latent_dim, output_dim, encoder_dim, extra = 128, 16, 32, 1
    input_dim = output_dim + 2 * latent_dim  # actuator_length == latent_dim
    batch, seq = 2, 8

    params = init_hiro_params(k_params, input_dim, output_dim, latent_dim,
                              encoder_dim, encoder_extra_layers=extra)
    padded_input = jax.random.normal(k_in, (batch, seq, input_dim), jnp.float32)

    x_t1 = jax.block_until_ready(hiro_forward(params, padded_input))
    assert x_t1.shape == (batch, seq, output_dim)
    assert bool(jnp.all(jnp.isfinite(x_t1)))

    # Pallas-diag path must match the fused XLA path bit-for-tolerance.
    x_t1_pallas = jax.block_until_ready(
        hiro_forward(params, padded_input, use_pallas_diag=True))
    assert jnp.allclose(x_t1, x_t1_pallas, atol=1e-5, rtol=1e-5)

    print("KERNEL_OK")
</pallas_src>

<mosaic_0001>
module attributes {stable_mosaic.version = 11 : i64} {
  func.func @_diag_scale_kernel(%arg0: i32, %arg1: i32, %arg2: memref<1x256xf32, #tpu.memory_space<vmem>>, %arg3: memref<256x256xf32, #tpu.memory_space<vmem>>, %arg4: memref<256x256xf32, #tpu.memory_space<vmem>>) attributes {dimension_semantics = [#tpu.dimension_semantics<parallel>, #tpu.dimension_semantics<parallel>], iteration_bounds = array<i64: 2, 1>, scalar_prefetch = 0 : i64, scratch_operands = 0 : i64, tpu.core_type = #tpu.core_type<tc>, window_params = [{transform_indices = @transform_0, window_bounds = array<i64: 1, 256>}, {transform_indices = @transform_1, window_bounds = array<i64: 256, 256>}, {transform_indices = @transform_2, window_bounds = array<i64: 256, 256>}]} {
    %c0 = arith.constant 0 : index
    %c0_0 = arith.constant 0 : index
    %0 = vector.load %arg2[%c0, %c0_0] : memref<1x256xf32, #tpu.memory_space<vmem>>, vector<1x256xf32>
    %cst = arith.constant -0.949999988 : f32
    %cst_1 = arith.constant 0.949999988 : f32
    %1 = vector.broadcast %cst : f32 to vector<1x256xf32>
    %2 = arith.maximumf %1, %0 : vector<1x256xf32>
    %3 = vector.broadcast %cst_1 : f32 to vector<1x256xf32>
    %4 = arith.minimumf %3, %2 : vector<1x256xf32>
    %c0_2 = arith.constant 0 : index
    %c0_3 = arith.constant 0 : index
    %5 = vector.load %arg3[%c0_2, %c0_3] : memref<256x256xf32, #tpu.memory_space<vmem>>, vector<256x256xf32>
    %6 = vector.broadcast %4 : vector<1x256xf32> to vector<256x256xf32>
    %7 = arith.mulf %5, %6 : vector<256x256xf32>
    %c0_4 = arith.constant 0 : index
    %c0_5 = arith.constant 0 : index
    %8 = vector.load %arg4[%c0_4, %c0_5] : memref<256x256xf32, #tpu.memory_space<vmem>>, vector<256x256xf32>
    tpu.vector_store %arg4[%c0_4, %c0_5], %7 {strides = array<i32>} : memref<256x256xf32, #tpu.memory_space<vmem>>, vector<256x256xf32>,
    return
  }
  func.func @transform_0(%arg0: i32, %arg1: i32) -> (i32, i32) {
    %c0_i32 = arith.constant 0 : i32
    %c0_i32_0 = arith.constant 0 : i32
    return %c0_i32, %arg1 : i32, i32
  }
  func.func @transform_1(%arg0: i32, %arg1: i32) -> (i32, i32) {
    %c0_i32 = arith.constant 0 : i32
    return %arg0, %arg1 : i32, i32
  }
  func.func @transform_2(%arg0: i32, %arg1: i32) -> (i32, i32) {
    %c0_i32 = arith.constant 0 : i32
    return %arg0, %arg1 : i32, i32
  }
}

</mosaic_0001>

<llo_original>
// kernel: tpu_custom_call.1
$region0: #{tpu_custom_call.1}
  #allocation0 [shape = 'u32[]', space=smem, size = 0x4, offset = 0x4, fixed_abs, tag = 'smem constant byte address 0x4 - core index']
  #allocation1 [shape = 'u32[144,128]{1,0:T(1,128)}', space=vmem, size = 0x12000, scoped, tag = 'internal scratch']
  %s0 = inlined_call_operand.hbm [shape: f32[1,256], index: 0, kind: input, shape index: {}]
  %s1 = inlined_call_operand.hbm [shape: f32[512,256], index: 1, kind: input, shape index: {}]
  %s2 = inlined_call_operand.hbm [shape: f32[512,256], index: 2, kind: output, shape index: {}]
  %s3 = sld [smem:[#allocation0]]
  $region49: #{tpu_custom_call.1} parent=0
    _
  %s5 = ssub.s32 1, %s3
  %s6 = scalar_select 0, %s5, %s3
  $region1: #{tpu_custom_call.1} parent=0
    #allocation2 [shape = 'u8[1024]{0}', space=vmem, size = 0x400, scoped, tag = 'input window, operand 0, single buffered']
    #allocation3 [shape = 's32[2]{0}', space=sflag, size = 0x8, scoped, tag = 'scoped memory for tpu_custom_call.1']
    #allocation4 [shape = 's32[2]{0}', space=sflag, size = 0x8, scoped, tag = 'scoped memory for tpu_custom_call.1']
    #allocation5 [shape = 'u8[524288]{0}', space=vmem, size = 0x80000, scoped, tag = 'input window, operand 1']
    #allocation6 [shape = 's32[2]{0}', space=sflag, size = 0x8, scoped, tag = 'scoped memory for tpu_custom_call.1']
    #allocation7 [shape = 'u8[524288]{0}', space=vmem, size = 0x80000, scoped, tag = 'output window, operand 0']
    %7 = vsyncpa [#allocation3], 0
    %8 = vsyncpa [#allocation6], 0
    %s9 = scalar_lea.sflag [#allocation6], 1
    %10 = vsyncpa %s9, 0
    %11 = vsyncpa [#allocation4], 0
    %s12 = scalar_lea.sflag [#allocation4], 1
    %13 = vsyncpa %s12, 0
    loop: start=0, step=1, limit=4
    $region2: #{tpu_custom_call.1} parent=1 // loop_pre_header
      _
    $region3: #{tpu_custom_call.1} parent=1 // loop_header
      %s15 = sphi 0, %s19
      %p16 = scmp.ge.s32.totalorder %s15, 4
      %s22 = sphi 0, %s34
      %s23 = sphi 0, %s30
      %s24 = sphi 0, %s22
      %s25 = sphi 0, %s23
      %s26 = sphi 0, %s24
      %s27 = sphi 0, %s25
      %s37 = sphi 0, %s39
      %s40 = sphi 0, %s37
      %s41 = sphi 0, %s40
      %s57 = sphi 0, %s41
      %s65 = sphi 0, %s67
      %s68 = sphi 0, %s65
      %s69 = sphi 0, %s68
      %s85 = sphi 0, %s69
      %s93 = sphi 0, %s95
      %s96 = sphi 0, %s93
      %s97 = sphi 0, %s96
      %s113 = sphi 0, %s97
    $region4: #{tpu_custom_call.1} parent=1 // loop_header_branch
      %18 = sbr.rel (%p16) target = $region8
    $region5: #{tpu_custom_call.1} parent=1 // loop_body
      %s20 = ssub.s32 %s15, 1
      %s21 = ssub.s32 %s15, 2
      %s28 = sadd.s32 1, %s23
      %p29 = scmp.ge.s32.totalorder %s28, 1
      %s30 = scalar_select %p29, 0, %s28
      %s31 = sadd.s32 1, %s22
      %s32 = scalar_select %p29, %s31, %s22
      %p33 = scmp.ge.s32.totalorder %s32, 2
      %s34 = scalar_select %p33, 0, %s32
      %s35 = ssub.s32 %s23, %s30
      %p36 = scmp.eq.s32.totalorder %s35, 0
      %s38 = sadd.s32 %s37, 1
      %s39 = scalar_select %p36, %s37, %s38
      %p42 = pneg %p36
      %p43 = scmp.eq.s32.totalorder %s15, 1
      %p44 = por %p42, %p43
      %p45 = scmp.ne.s32.totalorder %s37, %s40
      %p46 = scmp.eq.s32.totalorder %s15, 0
      %p47 = por %p45, %p46
      %p48 = scmp.ne.s32.totalorder %s37, %s40
      %p49 = scmp.eq.s32.totalorder %s20, 1
      %p50 = por %p48, %p49
      %p51 = scmp.ne.s32.totalorder %s40, %s41
      %p52 = scmp.eq.s32.totalorder %s20, 0
      %p53 = por %p51, %p52
      %p54 = scmp.ne.s32.totalorder %s40, %s41
      %p55 = scmp.eq.s32.totalorder %s21, 1
      %p56 = por %p54, %p55
      %p58 = scmp.ne.s32.totalorder %s41, %s57
      %p59 = scmp.eq.s32.totalorder %s21, 0
      %p60 = por %p58, %p59
      %s61 = ssub.s32 %s22, %s34
      %s62 = ssub.s32 %s23, %s30
      %s63 = sor.u32 %s61, %s62
      %p64 = scmp.eq.s32.totalorder %s63, 0
      %s66 = sadd.s32 %s65, 1
      %s67 = scalar_select %p64, %s65, %s66
      %p70 = pneg %p64
      %p71 = scmp.eq.s32.totalorder %s15, 1
      %p72 = por %p70, %p71
      %p73 = scmp.ne.s32.totalorder %s65, %s68
      %p74 = scmp.eq.s32.totalorder %s15, 0
      %p75 = por %p73, %p74
      %p76 = scmp.ne.s32.totalorder %s65, %s68
      %p77 = scmp.eq.s32.totalorder %s20, 1
      %p78 = por %p76, %p77
      %p79 = scmp.ne.s32.totalorder %s68, %s69
      %p80 = scmp.eq.s32.totalorder %s20, 0
      %p81 = por %p79, %p80
      %p82 = scmp.ne.s32.totalorder %s68, %s69
      %p83 = scmp.eq.s32.totalorder %s21, 1
      %p84 = por %p82, %p83
      %p86 = scmp.ne.s32.totalorder %s69, %s85
      %p87 = scmp.eq.s32.totalorder %s21, 0
      %p88 = por %p86, %p87
      %s89 = ssub.s32 %s22, %s34
      %s90 = ssub.s32 %s23, %s30
      %s91 = sor.u32 %s89, %s90
      %p92 = scmp.eq.s32.totalorder %s91, 0
      %s94 = sadd.s32 %s93, 1
      %s95 = scalar_select %p92, %s93, %s94
      %p98 = pneg %p92
      %p99 = scmp.eq.s32.totalorder %s15, 1
      %p100 = por %p98, %p99
      %p101 = scmp.ne.s32.totalorder %s93, %s96
      %p102 = scmp.eq.s32.totalorder %s15, 0
      %p103 = por %p101, %p102
      %p104 = scmp.ne.s32.totalorder %s93, %s96
      %p105 = scmp.eq.s32.totalorder %s20, 1
      %p106 = por %p104, %p105
      %p107 = scmp.ne.s32.totalorder %s96, %s97
      %p108 = scmp.eq.s32.totalorder %s20, 0
      %p109 = por %p107, %p108
      %p110 = scmp.ne.s32.totalorder %s96, %s97
      %p111 = scmp.eq.s32.totalorder %s21, 1
      %p112 = por %p110, %p111
      %p114 = scmp.ne.s32.totalorder %s97, %s113
      %p115 = scmp.eq.s32.totalorder %s21, 0
      %p116 = por %p114, %p115
      %p117 = scmp.le.s32.totalorder 1, %s15
      %p118 = scmp.lt.s32.totalorder %s15, 3
      %p119 = pnand %p117, %p118
      %p120 = pneg %p119
      // Predicated region
      $region9: #{tpu_custom_call.1} parent=5 // pred_check
        _
      $region10: #{tpu_custom_call.1} parent=5 // pred_check_branch
        %122 = sbr.rel (%p119) target = $region12
      $region11: #{tpu_custom_call.1} parent=5 // pred_region
        %s123 = ssub.s32 %s15, 1
        // Predicated region
        $region13: #{tpu_custom_call.1} parent=11 // pred_check
          %p124 = pneg %p53
        $region14: #{tpu_custom_call.1} parent=11 // pred_check_branch
          %126 = sbr.rel (%p124) target = $region16
        $region15: #{tpu_custom_call.1} parent=11 // pred_region
          %s127 = smul.u32 2, %s25
          %s129 = ssub.s32 32, 32
          %130 = vsyncadd [#allocation3], %s129
          %s131 = smul.addr %s127, 16
          %s132 = scalar_lea.hbm %s0, %s131
          %s134 = sshll.u32 [#allocation2], 4
          %s135 = int_to_ptr.vmem [resolvable:$true] %s134
          %137 = dma.hbm_to_vmem [thread:$0]  %s132, 32, %s135, [#allocation3]
        $region16: #{tpu_custom_call.1} parent=11 // pred_fallthru
          _
      $region12: #{tpu_custom_call.1} parent=5 // pred_fallthru
        _
      %p138 = scmp.lt.s32.totalorder %s15, 2
      // Predicated region
      $region17: #{tpu_custom_call.1} parent=5 // pred_check
        %p139 = pneg %p138
      $region18: #{tpu_custom_call.1} parent=5 // pred_check_branch
        %141 = sbr.rel (%p139) target = $region20
      $region19: #{tpu_custom_call.1} parent=5 // pred_region
        // Predicated region
        $region21: #{tpu_custom_call.1} parent=19 // pred_check
          %p142 = pneg %p75
        $region22: #{tpu_custom_call.1} parent=19 // pred_check_branch
          %144 = sbr.rel (%p142) target = $region24
        $region23: #{tpu_custom_call.1} parent=19 // pred_region
          %s145 = sand.u32 %s65, 1
          %s146 = scalar_lea.sflag [#allocation6], %s145
          %s147 = sand.u32 %s65, 1
          %s148 = smul.addr %s147, 512
          %s149 = scalar_lea.vmem [#allocation5], %s148
          %s150 = smul.u32 32, %s22
          %s151 = smul.u32 2, %s23
          %s153 = ssub.s32 8192, 8192
          %154 = vsyncadd %s146, %s153
          %s155 = smul.addr %s150, 2
          %s156 = sadd.s32 %s151, %s155
          %s157 = smul.addr %s156, 128
          %s158 = scalar_lea.hbm %s1, %s157
          %s159 = sshll.u32 %s149, 4
          %s160 = int_to_ptr.vmem [resolvable:$true] %s159
          %165 = dma.hbm_to_vmem [thread:$0]  %s158, 8192, %s160, %s146, 256, 256, 16
        $region24: #{tpu_custom_call.1} parent=19 // pred_fallthru
          _
      $region20: #{tpu_custom_call.1} parent=5 // pred_fallthru
        _
      %p166 = scmp.le.s32.totalorder 1, %s15
      %p167 = scmp.lt.s32.totalorder %s15, 3
      %p168 = pnand %p166, %p167
      %p169 = pneg %p168
      // Predicated region
      $region25: #{tpu_custom_call.1} parent=5 // pred_check
        _
      $region26: #{tpu_custom_call.1} parent=5 // pred_check_branch
        %171 = sbr.rel (%p168) target = $region28
      $region27: #{tpu_custom_call.1} parent=5 // pred_region
        %s172 = ssub.s32 %s15, 1
        // Predicated region
        $region29: #{tpu_custom_call.1} parent=27 // pred_check
          %p173 = pneg %p53
        $region30: #{tpu_custom_call.1} parent=27 // pred_check_branch
          %175 = sbr.rel (%p173) target = $region32
        $region31: #{tpu_custom_call.1} parent=27 // pred_region
          %176 = dma.done [#allocation3], 32
        $region32: #{tpu_custom_call.1} parent=27 // pred_fallthru
          _
        %s177 = sand.u32 %s68, 1
        %s178 = scalar_lea.sflag [#allocation6], %s177
        %s179 = sand.u32 %s68, 1
        %s180 = smul.addr %s179, 512
        %s181 = scalar_lea.vmem [#allocation5], %s180
        // Predicated region
        $region33: #{tpu_custom_call.1} parent=27 // pred_check
          %p182 = pneg %p81
        $region34: #{tpu_custom_call.1} parent=27 // pred_check_branch
          %184 = sbr.rel (%p182) target = $region36
        $region35: #{tpu_custom_call.1} parent=27 // pred_region
          %185 = dma.done %s178, 8192
        $region36: #{tpu_custom_call.1} parent=27 // pred_fallthru
          _
        %p186 = pneg %p53
        %p187 = pneg %p50
        %s188 = sand.u32 %s68, 1
        %s189 = scalar_lea.sflag [#allocation6], %s188
        %s190 = sand.u32 %s68, 1
        %s191 = smul.addr %s190, 512
        %s192 = scalar_lea.vmem [#allocation5], %s191
        %p193 = pneg %p81
        %p194 = pneg %p78
        %p195 = pneg %p109
        %p196 = pneg %p106
        %s197 = sand.u32 %s96, 1
        %s198 = scalar_lea.sflag [#allocation4], %s197
        %s199 = sand.u32 %s96, 1
        %s200 = smul.addr %s199, 512
        %s201 = scalar_lea.vmem [#allocation7], %s200
        %s202 = smul.u32 2, %s25
        %s203 = smul.u32 32, %s24
        %s204 = smul.u32 2, %s25
        %s205 = smul.u32 32, %s24
        %s206 = smul.u32 2, %s25
        %v207 = vld [vmem:[#allocation2] sm:$0x3]
        %v208 = vmax.f32 %v207, -0.95
        %v209 = vmin.f32 %v208, 0.95
        %v210 = vld [vmem:[%s181] sm:$0xff]
        %v211 = vld [vmem:[%s181 + $0x8] sm:$0xff]
        %v212 = vld [vmem:[%s181 + $0x10] sm:$0xff]
        %v213 = vld [vmem:[%s181 + $0x18] sm:$0xff]
        %v214 = vld [vmem:[%s181 + $0x20] sm:$0xff]
        %v215 = vld [vmem:[%s181 + $0x28] sm:$0xff]
        %v216 = vld [vmem:[%s181 + $0x30] sm:$0xff]
        %v217 = vld [vmem:[%s181 + $0x38] sm:$0xff]
        %v218 = vld [vmem:[%s181 + $0x40] sm:$0xff]
        %v219 = vld [vmem:[%s181 + $0x48] sm:$0xff]
        %v220 = vld [vmem:[%s181 + $0x50] sm:$0xff]
        %v221 = vld [vmem:[%s181 + $0x58] sm:$0xff]
        %v222 = vld [vmem:[%s181 + $0x60] sm:$0xff]
        %v223 = vld [vmem:[%s181 + $0x68] sm:$0xff]
        %v224 = vld [vmem:[%s181 + $0x70] sm:$0xff]
        %v225 = vld [vmem:[%s181 + $0x78] sm:$0xff]
        %v226 = vld [vmem:[%s181 + $0x80] sm:$0xff]
        %v227 = vld [vmem:[%s181 + $0x88] sm:$0xff]
        %v228 = vld [vmem:[%s181 + $0x90] sm:$0xff]
        %v229 = vld [vmem:[%s181 + $0x98] sm:$0xff]
        %v230 = vld [vmem:[%s181 + $0xa0] sm:$0xff]
        %v231 = vld [vmem:[%s181 + $0xa8] sm:$0xff]
        %v232 = vld [vmem:[%s181 + $0xb0] sm:$0xff]
        %v233 = vld [vmem:[%s181 + $0xb8] sm:$0xff]
        %v234 = vld [vmem:[%s181 + $0xc0] sm:$0xff]
        %v235 = vld [vmem:[%s181 + $0xc8] sm:$0xff]
        %v236 = vld [vmem:[%s181 + $0xd0] sm:$0xff]
        %v237 = vld [vmem:[%s181 + $0xd8] sm:$0xff]
        %v238 = vld [vmem:[%s181 + $0xe0] sm:$0xff]
        %v239 = vld [vmem:[%s181 + $0xe8] sm:$0xff]
        %v240 = vld [vmem:[%s181 + $0xf0] sm:$0xff]
        %v241 = vld [vmem:[%s181 + $0xf8] sm:$0xff]
        %v242 = vld [vmem:[%s181 + $0x100] sm:$0xff]
        %v243 = vld [vmem:[%s181 + $0x108] sm:$0xff]
        %v244 = vld [vmem:[%s181 + $0x110] sm:$0xff]
        %v245 = vld [vmem:[%s181 + $0x118] sm:$0xff]
        %v246 = vld [vmem:[%s181 + $0x120] sm:$0xff]
        %v247 = vld [vmem:[%s181 + $0x128] sm:$0xff]
        %v248 = vld [vmem:[%s181 + $0x130] sm:$0xff]
        %v249 = vld [vmem:[%s181 + $0x138] sm:$0xff]
        %v250 = vld [vmem:[%s181 + $0x140] sm:$0xff]
        %v251 = vld [vmem:[%s181 + $0x148] sm:$0xff]
        %v252 = vld [vmem:[%s181 + $0x150] sm:$0xff]
        %v253 = vld [vmem:[%s181 + $0x158] sm:$0xff]
        %v254 = vld [vmem:[%s181 + $0x160] sm:$0xff]
        %v255 = vld [vmem:[%s181 + $0x168] sm:$0xff]
        %v256 = vld [vmem:[%s181 + $0x170] sm:$0xff]
        %v257 = vld [vmem:[%s181 + $0x178] sm:$0xff]
        %v258 = vld [vmem:[%s181 + $0x180] sm:$0xff]
        %v259 = vld [vmem:[%s181 + $0x188] sm:$0xff]
        %v260 = vld [vmem:[%s181 + $0x190] sm:$0xff]
        %v261 = vld [vmem:[%s181 + $0x198] sm:$0xff]
        %v262 = vld [vmem:[%s181 + $0x1a0] sm:$0xff]
        %v263 = vld [vmem:[%s181 + $0x1a8] sm:$0xff]
        %v264 = vld [vmem:[%s181 + $0x1b0] sm:$0xff]
        %v265 = vld [vmem:[%s181 + $0x1b8] sm:$0xff]
        %v266 = vld [vmem:[%s181 + $0x1c0] sm:$0xff]
        %v267 = vld [vmem:[%s181 + $0x1c8] sm:$0xff]
        %v268 = vld [vmem:[%s181 + $0x1d0] sm:$0xff]
        %v269 = vld [vmem:[%s181 + $0x1d8] sm:$0xff]
        %v270 = vld [vmem:[%s181 + $0x1e0] sm:$0xff]
        %v271 = vld [vmem:[%s181 + $0x1e8] sm:$0xff]
        %v272 = vld [vmem:[%s181 + $0x1f0] sm:$0xff]
        %v273 = vld [vmem:[%s181 + $0x1f8] sm:$0xff]
        %v275 = vlaneseq
        %v276 = vshrl.u32 %v275, 7
        %v277 = vsub.s32 0, %v276
        %v278 = vrot.slane %v209, %v277
        %v279 = vlaneseq
        %v280 = vshrl.u32 %v279, 7
        %v281 = vsub.s32 1, %v280
        %v282 = vrot.slane %v209, %v281
        %v285 = vmul.f32 %v210, %v278
        %v286 = vmul.f32 %v211, %v282
        %v287 = vmul.f32 %v212, %v278
        %v288 = vmul.f32 %v213, %v282
        %v289 = vmul.f32 %v214, %v278
        %v290 = vmul.f32 %v215, %v282
        %v291 = vmul.f32 %v216, %v278
        %v292 = vmul.f32 %v217, %v282
        %v293 = vmul.f32 %v218, %v278
        %v294 = vmul.f32 %v219, %v282
        %v295 = vmul.f32 %v220, %v278
        %v296 = vmul.f32 %v221, %v282
        %v297 = vmul.f32 %v222, %v278
        %v298 = vmul.f32 %v223, %v282
        %v299 = vmul.f32 %v224, %v278
        %v300 = vmul.f32 %v225, %v282
        %v301 = vmul.f32 %v226, %v278
        %v302 = vmul.f32 %v227, %v282
        %v303 = vmul.f32 %v228, %v278
        %v304 = vmul.f32 %v229, %v282
        %v305 = vmul.f32 %v230, %v278
        %v306 = vmul.f32 %v231, %v282
        %v307 = vmul.f32 %v232, %v278
        %v308 = vmul.f32 %v233, %v282
        %v309 = vmul.f32 %v234, %v278
        %v310 = vmul.f32 %v235, %v282
        %v311 = vmul.f32 %v236, %v278
        %v312 = vmul.f32 %v237, %v282
        %v313 = vmul.f32 %v238, %v278
        %v314 = vmul.f32 %v239, %v282
        %v315 = vmul.f32 %v240, %v278
        %v316 = vmul.f32 %v241, %v282
        %v317 = vmul.f32 %v242, %v278
        %v318 = vmul.f32 %v243, %v282
        %v319 = vmul.f32 %v244, %v278
        %v320 = vmul.f32 %v245, %v282
        %v321 = vmul.f32 %v246, %v278
        %v322 = vmul.f32 %v247, %v282
        %v323 = vmul.f32 %v248, %v278
        %v324 = vmul.f32 %v249, %v282
        %v325 = vmul.f32 %v250, %v278
        %v326 = vmul.f32 %v251, %v282
        %v327 = vmul.f32 %v252, %v278
        %v328 = vmul.f32 %v253, %v282
        %v329 = vmul.f32 %v254, %v278
        %v330 = vmul.f32 %v255, %v282
        %v331 = vmul.f32 %v256, %v278
        %v332 = vmul.f32 %v257, %v282
        %v333 = vmul.f32 %v258, %v278
        %v334 = vmul.f32 %v259, %v282
        %v335 = vmul.f32 %v260, %v278
        %v336 = vmul.f32 %v261, %v282
        %v337 = vmul.f32 %v262, %v278
        %v338 = vmul.f32 %v263, %v282
        %v339 = vmul.f32 %v264, %v278
        %v340 = vmul.f32 %v265, %v282
        %v341 = vmul.f32 %v266, %v278
        %v342 = vmul.f32 %v267, %v282
        %v343 = vmul.f32 %v268, %v278
        %v344 = vmul.f32 %v269, %v282
        %v345 = vmul.f32 %v270, %v278
        %v346 = vmul.f32 %v271, %v282
        %v347 = vmul.f32 %v272, %v278
        %v348 = vmul.f32 %v273, %v282
        %349 = vst [vmem:[%s201] sm:$0xff] %v285
        %350 = vst [vmem:[%s201 + $0x8] sm:$0xff] %v286
        %351 = vst [vmem:[%s201 + $0x10] sm:$0xff] %v287
        %352 = vst [vmem:[%s201 + $0x18] sm:$0xff] %v288
        %353 = vst [vmem:[%s201 + $0x20] sm:$0xff] %v289
        %354 = vst [vmem:[%s201 + $0x28] sm:$0xff] %v290
        %355 = vst [vmem:[%s201 + $0x30] sm:$0xff] %v291
        %356 = vst [vmem:[%s201 + $0x38] sm:$0xff] %v292
        %357 = vst [vmem:[%s201 + $0x40] sm:$0xff] %v293
        %358 = vst [vmem:[%s201 + $0x48] sm:$0xff] %v294
        %359 = vst [vmem:[%s201 + $0x50] sm:$0xff] %v295
        %360 = vst [vmem:[%s201 + $0x58] sm:$0xff] %v296
        %361 = vst [vmem:[%s201 + $0x60] sm:$0xff] %v297
        %362 = vst [vmem:[%s201 + $0x68] sm:$0xff] %v298
        %363 = vst [vmem:[%s201 + $0x70] sm:$0xff] %v299
        %364 = vst [vmem:[%s201 + $0x78] sm:$0xff] %v300
        %365 = vst [vmem:[%s201 + $0x80] sm:$0xff] %v301
        %366 = vst [vmem:[%s201 + $0x88] sm:$0xff] %v302
        %367 = vst [vmem:[%s201 + $0x90] sm:$0xff] %v303
        %368 = vst [vmem:[%s201 + $0x98] sm:$0xff] %v304
        %369 = vst [vmem:[%s201 + $0xa0] sm:$0xff] %v305
        %370 = vst [vmem:[%s201 + $0xa8] sm:$0xff] %v306
        %371 = vst [vmem:[%s201 + $0xb0] sm:$0xff] %v307
        %372 = vst [vmem:[%s201 + $0xb8] sm:$0xff] %v308
        %373 = vst [vmem:[%s201 + $0xc0] sm:$0xff] %v309
        %374 = vst [vmem:[%s201 + $0xc8] sm:$0xff] %v310
        %375 = vst [vmem:[%s201 + $0xd0] sm:$0xff] %v311
        %376 = vst [vmem:[%s201 + $0xd8] sm:$0xff] %v312
        %377 = vst [vmem:[%s201 + $0xe0] sm:$0xff] %v313
        %378 = vst [vmem:[%s201 + $0xe8] sm:$0xff] %v314
        %379 = vst [vmem:[%s201 + $0xf0] sm:$0xff] %v315
        %380 = vst [vmem:[%s201 + $0xf8] sm:$0xff] %v316
        %381 = vst [vmem:[%s201 + $0x100] sm:$0xff] %v317
        %382 = vst [vmem:[%s201 + $0x108] sm:$0xff] %v318
        %383 = vst [vmem:[%s201 + $0x110] sm:$0xff] %v319
        %384 = vst [vmem:[%s201 + $0x118] sm:$0xff] %v320
        %385 = vst [vmem:[%s201 + $0x120] sm:$0xff] %v321
        %386 = vst [vmem:[%s201 + $0x128] sm:$0xff] %v322
        %387 = vst [vmem:[%s201 + $0x130] sm:$0xff] %v323
        %388 = vst [vmem:[%s201 + $0x138] sm:$0xff] %v324
        %389 = vst [vmem:[%s201 + $0x140] sm:$0xff] %v325
        %390 = vst [vmem:[%s201 + $0x148] sm:$0xff] %v326
        %391 = vst [vmem:[%s201 + $0x150] sm:$0xff] %v327
        %392 = vst [vmem:[%s201 + $0x158] sm:$0xff] %v328
        %393 = vst [vmem:[%s201 + $0x160] sm:$0xff] %v329
        %394 = vst [vmem:[%s201 + $0x168] sm:$0xff] %v330
        %395 = vst [vmem:[%s201 + $0x170] sm:$0xff] %v331
        %396 = vst [vmem:[%s201 + $0x178] sm:$0xff] %v332
        %397 = vst [vmem:[%s201 + $0x180] sm:$0xff] %v333
        %398 = vst [vmem:[%s201 + $0x188] sm:$0xff] %v334
        %399 = vst [vmem:[%s201 + $0x190] sm:$0xff] %v335
        %400 = vst [vmem:[%s201 + $0x198] sm:$0xff] %v336
        %401 = vst [vmem:[%s201 + $0x1a0] sm:$0xff] %v337
        %402 = vst [vmem:[%s201 + $0x1a8] sm:$0xff] %v338
        %403 = vst [vmem:[%s201 + $0x1b0] sm:$0xff] %v339
        %404 = vst [vmem:[%s201 + $0x1b8] sm:$0xff] %v340
        %405 = vst [vmem:[%s201 + $0x1c0] sm:$0xff] %v341
        %406 = vst [vmem:[%s201 + $0x1c8] sm:$0xff] %v342
        %407 = vst [vmem:[%s201 + $0x1d0] sm:$0xff] %v343
        %408 = vst [vmem:[%s201 + $0x1d8] sm:$0xff] %v344
        %409 = vst [vmem:[%s201 + $0x1e0] sm:$0xff] %v345
        %410 = vst [vmem:[%s201 + $0x1e8] sm:$0xff] %v346
        %411 = vst [vmem:[%s201 + $0x1f0] sm:$0xff] %v347
        %412 = vst [vmem:[%s201 + $0x1f8] sm:$0xff] %v348
        %s413 = sand.u32 %s96, 1
        %s414 = scalar_lea.sflag [#allocation4], %s413
        %s415 = sand.u32 %s96, 1
        %s416 = smul.addr %s415, 512
        %s417 = scalar_lea.vmem [#allocation7], %s416
        // Predicated region
        $region37: #{tpu_custom_call.1} parent=27 // pred_check
          %p418 = pneg %p106
        $region38: #{tpu_custom_call.1} parent=27 // pred_check_branch
          %420 = sbr.rel (%p418) target = $region40
        $region39: #{tpu_custom_call.1} parent=27 // pred_region
          %s421 = smul.u32 32, %s24
          %s422 = smul.u32 2, %s25
          %s424 = ssub.s32 8192, 8192
          %425 = vsyncadd %s414, %s424
          %s426 = smul.addr %s421, 2
          %s427 = sadd.s32 %s422, %s426
          %s428 = smul.addr %s427, 128
          %s429 = scalar_lea.hbm %s2, %s428
          %s430 = sshll.u32 %s417, 4
          %s431 = int_to_ptr.vmem [resolvable:$true] %s430
          %436 = dma.vmem_to_hbm [thread:$0]  %s431, 8192, %s429, %s414, 256, 256, 16
        $region40: #{tpu_custom_call.1} parent=27 // pred_fallthru
          _
      $region28: #{tpu_custom_call.1} parent=5 // pred_fallthru
        _
      %p437 = scmp.le.s32.totalorder 2, %s15
      // Predicated region
      $region41: #{tpu_custom_call.1} parent=5 // pred_check
        %p438 = pneg %p437
      $region42: #{tpu_custom_call.1} parent=5 // pred_check_branch
        %440 = sbr.rel (%p438) target = $region44
      $region43: #{tpu_custom_call.1} parent=5 // pred_region
        %s441 = ssub.s32 %s15, 2
        // Predicated region
        $region45: #{tpu_custom_call.1} parent=43 // pred_check
          %p442 = pneg %p112
        $region46: #{tpu_custom_call.1} parent=43 // pred_check_branch
          %444 = sbr.rel (%p442) target = $region48
        $region47: #{tpu_custom_call.1} parent=43 // pred_region
          %s445 = sand.u32 %s97, 1
          %s446 = scalar_lea.sflag [#allocation4], %s445
          %s447 = sand.u32 %s97, 1
          %s448 = smul.addr %s447, 512
          %s449 = scalar_lea.vmem [#allocation7], %s448
          %450 = dma.done %s446, 8192
        $region48: #{tpu_custom_call.1} parent=43 // pred_fallthru
          _
      $region44: #{tpu_custom_call.1} parent=5 // pred_fallthru
        _
    $region6: #{tpu_custom_call.1} parent=1 // loop_footer
      %s19 = sadd.s32 1, %s15
    $region7: #{tpu_custom_call.1} parent=1 // loop_footer_branch
      %14 = sbr.rel target = $region3
    $region8: #{tpu_custom_call.1} parent=1 // loop_exit
      _
    %451 = vsyncpa [#allocation3], 1
    %s452 = scalar_lea.sflag [#allocation3], 1
    %453 = vsyncpa %s452, 1
    %454 = vsyncpa [#allocation6], 1
    %s455 = scalar_lea.sflag [#allocation6], 1
    %456 = vsyncpa %s455, 1
    %457 = vsyncpa [#allocation4], 1
    %s458 = scalar_lea.sflag [#allocation4], 1
    %459 = vsyncpa %s458, 1

</llo_original>
